<compile_context>
chip_gen: v7x
topology: tpu7x:2x2x1
jax: 0.10.0
libtpu: 0.0.40
codegen_flags: <defaults>
</compile_context>

<pallas_src>
import jax
import jax.numpy as jnp
from jax.experimental import pallas as pl
from jax.experimental.pallas import tpu as pltpu


def linear_add_relu_kernel(x_ref, w_ref, b_ref, other_ref, o_ref):
    # One MXU pass + VPU epilogue (bias add, residual add, ReLU).
    y = jnp.dot(x_ref[...], w_ref[...], preferred_element_type=jnp.float32)
    y = y + b_ref[...]          # bias add, in-kernel (not pre-folded)
    y = y + other_ref[...]      # residual add, in-kernel
    o_ref[...] = jnp.maximum(y, 0.0).astype(o_ref.dtype)


def model_forward(x, w, b, other, *, block_b=512):
    """y = relu(x @ W + b + other).

    x:     (B, in_features)         = (B, 36)
    w:     (in_features, out_feats) = (36, 10)   (torch W^T)
    b:     (1, out_features)        = (1, 10)
    other: (1, out_features)        = (1, 10)
    """
    B, K = x.shape
    N = w.shape[1]
    vmem = pltpu.MemorySpace.VMEM

    if B <= block_b:
        # Tiny-batch path: whole problem fits trivially in VMEM; single
        # un-pipelined invocation, no grid, no index_maps.
        return pl.pallas_call(
            linear_add_relu_kernel,
            out_shape=jax.ShapeDtypeStruct((B, N), x.dtype),
            in_specs=[
                pl.BlockSpec(memory_space=vmem),   # x
                pl.BlockSpec(memory_space=vmem),   # w
                pl.BlockSpec(memory_space=vmem),   # b
                pl.BlockSpec(memory_space=vmem),   # other
            ],
            out_specs=pl.BlockSpec(memory_space=vmem),
        )(x, w, b, other)

    # Large-batch path: grid over batch, weights/bias/other resident.
    n_blocks = pl.cdiv(B, block_b)
    b_pad = n_blocks * block_b
    if b_pad != B:
        x = jnp.pad(x, ((0, b_pad - B), (0, 0)))
    out = pl.pallas_call(
        linear_add_relu_kernel,
        out_shape=jax.ShapeDtypeStruct((b_pad, N), x.dtype),
        grid=(n_blocks,),
        in_specs=[
            pl.BlockSpec((block_b, K), lambda i: (i, 0)),   # x: tiled on batch
            pl.BlockSpec((K, N), lambda i: (0, 0)),         # w: resident
            pl.BlockSpec((1, N), lambda i: (0, 0)),         # b: resident
            pl.BlockSpec((1, N), lambda i: (0, 0)),         # other: resident
        ],
        out_specs=pl.BlockSpec((block_b, N), lambda i: (i, 0)),
        compiler_params=pltpu.CompilerParams(
            dimension_semantics=("parallel",)),
    )(x, w, b, other)
    return out[:B]


if __name__ == "__main__":
    key = jax.random.PRNGKey(0)
    k_x, k_w, k_b, k_o, k_xb = jax.random.split(key, 5)

    B, IN_F, OUT_F = 1, 36, 10

    # Deterministic inputs / parameters (same shapes as torch.nn.Linear(36, 10)).
    x = jax.random.normal(k_x, (B, IN_F), dtype=jnp.float32)
    w_torch = jax.random.normal(k_w, (OUT_F, IN_F), dtype=jnp.float32) * 0.1
    b = jax.random.normal(k_b, (OUT_F,), dtype=jnp.float32) * 0.1
    other = jax.random.normal(k_o, (1, OUT_F), dtype=jnp.float32)

    w = w_torch.T               # (IN_F, OUT_F) for x @ W
    b2d = b.reshape(1, OUT_F)

    def ref_fn(xx):
        return jnp.maximum(xx @ w + b2d + other, 0.0)

    # --- module-native shape (B=1): un-gridded path ---
    out = model_forward(x, w, b2d, other)
    jax.block_until_ready(out)
    assert out.shape == (B, OUT_F)
    assert jnp.allclose(out, ref_fn(x), atol=1e-5, rtol=1e-5)

    # --- large-batch path: batch grid, resident weights ---
    BIG_B = 1024
    x_big = jax.random.normal(k_xb, (BIG_B, IN_F), dtype=jnp.float32)
    out_big = model_forward(x_big, w, b2d, other, block_b=512)
    jax.block_until_ready(out_big)
    assert out_big.shape == (BIG_B, OUT_F)
    assert jnp.allclose(out_big, ref_fn(x_big), atol=1e-5, rtol=1e-5)

    print("KERNEL_OK")
</pallas_src>

<mosaic_0001>
module attributes {stable_mosaic.version = 11 : i64} {
  func.func @linear_add_relu_kernel(%arg0: memref<1x36xf32, #tpu.memory_space<vmem>>, %arg1: memref<36x10xf32, #tpu.memory_space<vmem>>, %arg2: memref<1x10xf32, #tpu.memory_space<vmem>>, %arg3: memref<1x10xf32, #tpu.memory_space<vmem>>, %arg4: memref<1x10xf32, #tpu.memory_space<vmem>>) attributes {dimension_semantics = [], scalar_prefetch = 0 : i64, scratch_operands = 0 : i64, tpu.core_type = #tpu.core_type<tc>} {
    %c0 = arith.constant 0 : index
    %c0_0 = arith.constant 0 : index
    %0 = vector.load %arg0[%c0, %c0_0] : memref<1x36xf32, #tpu.memory_space<vmem>>, vector<1x36xf32>
    %c0_1 = arith.constant 0 : index
    %c0_2 = arith.constant 0 : index
    %1 = vector.load %arg1[%c0_1, %c0_2] : memref<36x10xf32, #tpu.memory_space<vmem>>, vector<36x10xf32>
    %cst = arith.constant dense<0.000000e+00> : vector<1x10xf32>
    %2 = tpu.matmul %0, %1, %cst {dimension_numbers = #tpu.dot_dimension_numbers<[1], [0], [0], [1], [0, 0, 1, 1], [], []>} : vector<1x36xf32>, vector<36x10xf32>, vector<1x10xf32> -> vector<1x10xf32>
    %c0_3 = arith.constant 0 : index
    %c0_4 = arith.constant 0 : index
    %3 = vector.load %arg2[%c0_3, %c0_4] : memref<1x10xf32, #tpu.memory_space<vmem>>, vector<1x10xf32>
    %4 = arith.addf %2, %3 : vector<1x10xf32>
    %c0_5 = arith.constant 0 : index
    %c0_6 = arith.constant 0 : index
    %5 = vector.load %arg3[%c0_5, %c0_6] : memref<1x10xf32, #tpu.memory_space<vmem>>, vector<1x10xf32>
    %6 = arith.addf %4, %5 : vector<1x10xf32>
    %cst_7 = arith.constant 0.000000e+00 : f32
    %7 = vector.broadcast %cst_7 : f32 to vector<1x10xf32>
    %8 = arith.maximumf %6, %7 : vector<1x10xf32>
    %c0_8 = arith.constant 0 : index
    %c0_9 = arith.constant 0 : index
    %9 = vector.load %arg4[%c0_8, %c0_9] : memref<1x10xf32, #tpu.memory_space<vmem>>, vector<1x10xf32>
    tpu.vector_store %arg4[%c0_8, %c0_9], %8 {strides = array<i32>} : memref<1x10xf32, #tpu.memory_space<vmem>>, vector<1x10xf32>,
    return
  }
}

</mosaic_0001>

<llo_original>
// kernel: tpu_custom_call.1
$region0: #{tpu_custom_call.1}
  #allocation0 [shape = 'u32[]', space=smem, size = 0x4, offset = 0x4, fixed_abs, tag = 'smem constant byte address 0x4 - core index']
  #allocation1 [shape = 'u32[144,128]{1,0:T(1,128)}', space=vmem, size = 0x12000, scoped, tag = 'internal scratch']
  %s0 = inlined_call_operand.vmem [shape: f32[1,36], index: 0, kind: input, shape index: {}]
  %s1 = inlined_call_operand.vmem [shape: f32[36,10], index: 1, kind: input, shape index: {}]
  %s2 = inlined_call_operand.vmem [shape: f32[1,10], index: 2, kind: input, shape index: {}]
  %s3 = inlined_call_operand.vmem [shape: f32[1,10], index: 3, kind: input, shape index: {}]
  %s4 = inlined_call_operand.hbm [shape: f32[1,10], index: 4, kind: output, shape index: {}]
  %s5 = sld [smem:[#allocation0]]
  $region26: #{tpu_custom_call.1} parent=0
    _
  %s7 = ssub.s32 1, %s5
  %s8 = scalar_select 0, %s7, %s5
  $region1: #{tpu_custom_call.1} parent=0
    #allocation2 [shape = 'u8[512]{0}', space=vmem, size = 0x400, scoped, tag = 'output window, operand 0, single buffered']
    #allocation3 [shape = 's32[1]{0}', space=sflag, size = 0x4, scoped, tag = 'scoped memory for tpu_custom_call.1']
    %9 = vsyncpa [#allocation3], 0
    // Predicated region
    $region2: #{tpu_custom_call.1} parent=1 // pred_check
      _
    $region3: #{tpu_custom_call.1} parent=1 // pred_check_branch
      %11 = sbr.rel (0) target = $region5
    $region4: #{tpu_custom_call.1} parent=1 // pred_region
      _
    $region5: #{tpu_custom_call.1} parent=1 // pred_fallthru
      _
    // Predicated region
    $region6: #{tpu_custom_call.1} parent=1 // pred_check
      _
    $region7: #{tpu_custom_call.1} parent=1 // pred_check_branch
      %13 = sbr.rel (0) target = $region9
    $region8: #{tpu_custom_call.1} parent=1 // pred_region
      _
    $region9: #{tpu_custom_call.1} parent=1 // pred_fallthru
      _
    // Predicated region
    $region10: #{tpu_custom_call.1} parent=1 // pred_check
      _
    $region11: #{tpu_custom_call.1} parent=1 // pred_check_branch
      %15 = sbr.rel (0) target = $region13
    $region12: #{tpu_custom_call.1} parent=1 // pred_region
      _
    $region13: #{tpu_custom_call.1} parent=1 // pred_fallthru
      _
    // Predicated region
    $region14: #{tpu_custom_call.1} parent=1 // pred_check
      _
    $region15: #{tpu_custom_call.1} parent=1 // pred_check_branch
      %17 = sbr.rel (0) target = $region17
    $region16: #{tpu_custom_call.1} parent=1 // pred_region
      _
    $region17: #{tpu_custom_call.1} parent=1 // pred_fallthru
      _
    %v18 = vld [vmem:[%s0] sm:$0x1]
    %v19 = vld [vmem:[%s1] sm:$0xff]
    %v20 = vld [vmem:[%s1 + $0x8] sm:$0xff]
    %v21 = vld [vmem:[%s1 + $0x10] sm:$0xff]
    %v22 = vld [vmem:[%s1 + $0x18] sm:$0xff]
    %v23 = vld [vmem:[%s1 + $0x20] sm:$0xf]
    %v24 = vld [vmem:[%s2] sm:$0x1]
    %vm25 = vcmask 293888
    %v27 = vsel %vm25, %v18, 0
    %vm29 = vcmask 1043456
    %v31 = vsel %vm29, %v23, 0
    %33 = vmatprep.subr.mxu0 0.0
    %34 = vmatpush1.msra.mxu0 %v19
    %35 = vmatprep.subr.mxu0 0.0
    %36 = vmatpush1.msra.mxu0 %v20
    %37 = vmatprep.subr.mxu0 0.0
    %38 = vmatpush1.msra.mxu0 %v21
    %39 = vmatprep.subr.mxu0 0.0
    %40 = vmatpush1.msra.mxu0 %v22
    %41 = vmatprep.subr.mxu0 0.0
    %42 = vmatpush1.msra.mxu0 %v31
    %43 = vmatprep.subr.mxu0 0.0
    %44 = vmatpush1.msra.mxu0 0.0
    %45 = vmatprep.subr.mxu0 0.0
    %46 = vmatpush1.msra.mxu0 0.0
    %47 = vmatprep.subr.mxu0 0.0
    %48 = vmatpush1.msra.mxu0 0.0
    %49 = vmatprep.subr.mxu0 0.0
    %50 = vmatpush1.msra.mxu0 0.0
    %51 = vmatprep.subr.mxu0 0.0
    %52 = vmatpush1.msra.mxu0 0.0
    %53 = vmatprep.subr.mxu0 0.0
    %54 = vmatpush1.msra.mxu0 0.0
    %55 = vmatprep.subr.mxu0 0.0
    %56 = vmatpush1.msra.mxu0 0.0
    %57 = vmatprep.subr.mxu0 0.0
    %58 = vmatpush1.msra.mxu0 0.0
    %59 = vmatprep.subr.mxu0 0.0
    %60 = vmatpush1.msra.mxu0 0.0
    %61 = vmatprep.subr.mxu0 0.0
    %62 = vmatpush1.msra.mxu0 0.0
    %63 = vmatprep.subr.mxu0 0.0
    %64 = vmatpush1.msra.mxu0 0.0
    %65 = vmatprep.subr.mxu0 0.0
    %66 = vmatpush1.msra.mxu0 0.0
    %67 = vmatprep.subr.mxu0 0.0
    %68 = vmatpush1.msra.mxu0 0.0
    %69 = vmatprep.subr.mxu0 0.0
    %70 = vmatpush1.msra.mxu0 0.0
    %71 = vmatprep.subr.mxu0 0.0
    %72 = vmatpush1.msra.mxu0 0.0
    %73 = vmatprep.subr.mxu0 0.0
    %74 = vmatpush1.msra.mxu0 0.0
    %75 = vmatprep.subr.mxu0 0.0
    %76 = vmatpush1.msra.mxu0 0.0
    %77 = vmatprep.subr.mxu0 0.0
    %78 = vmatpush1.msra.mxu0 0.0
    %79 = vmatprep.subr.mxu0 0.0
    %80 = vmatpush1.msra.mxu0 0.0
    %81 = vmatprep.subr.mxu0 0.0
    %82 = vmatpush1.msra.mxu0 0.0
    %83 = vmatprep.subr.mxu0 0.0
    %84 = vmatpush1.msra.mxu0 0.0
    %85 = vmatprep.subr.mxu0 0.0
    %86 = vmatpush1.msra.mxu0 0.0
    %87 = vmatprep.subr.mxu0 0.0
    %88 = vmatpush1.msra.mxu0 0.0
    %89 = vmatprep.subr.mxu0 0.0
    %90 = vmatpush1.msra.mxu0 0.0
    %91 = vmatprep.subr.mxu0 0.0
    %92 = vmatpush1.msra.mxu0 0.0
    %93 = vmatprep.subr.mxu0 0.0
    %94 = vmatpush1.msra.mxu0 0.0
    %95 = vmatprep.subr.mxu0 0.0
    %96 = vmatpush1.msra.mxu0 0.0
    %97 = vmatprep.mubr.f32.mxu0 0.0
    %98 = vmatmul.mubr.f32.gmra.mrb[0].mxu0 %v27
    %v99 = vpop.f32.mrb[0].mxu0
    %v100 = vadd.f32 %v24, %v99
    %v101 = vpop.f32.mrb[0].mxu0
    %102 = vdwg.mxu0
    %v103 = vld [vmem:[%s3] sm:$0x1]
    %v104 = vadd.f32 %v100, %v103
    %v105 = vmax.f32 %v104, 0.0
    %vm106 = vcmask 73728
    %107 = vst.msk [vmem:[#allocation2] sm:$0x1] %vm106, %v105
    // Predicated region
    $region18: #{tpu_custom_call.1} parent=1 // pred_check
      _
    $region19: #{tpu_custom_call.1} parent=1 // pred_check_branch
      %109 = sbr.rel (0) target = $region21
    $region20: #{tpu_custom_call.1} parent=1 // pred_region
      %s111 = ssub.s32 16, 16
      %112 = vsyncadd [#allocation3], %s111
      %s114 = sshll.u32 [#allocation2], 4
      %s115 = int_to_ptr.vmem [resolvable:$true] %s114
      %117 = dma.vmem_to_hbm [thread:$0]  %s115, 16, %s4, [#allocation3]
    $region21: #{tpu_custom_call.1} parent=1 // pred_fallthru
      _
    // Predicated region
    $region22: #{tpu_custom_call.1} parent=1 // pred_check
      _
    $region23: #{tpu_custom_call.1} parent=1 // pred_check_branch
      %119 = sbr.rel (0) target = $region25
    $region24: #{tpu_custom_call.1} parent=1 // pred_region
      %120 = dma.done [#allocation3], 16
    $region25: #{tpu_custom_call.1} parent=1 // pred_fallthru
      _
    %121 = vsyncpa [#allocation3], 1

</llo_original>
